<compile_context>
chip_gen: v6e
topology: v6e:2x2x1
jax: 0.10.0
libtpu: 0.0.40
codegen_flags: <defaults>
</compile_context>

<pallas_src>
import jax
import jax.numpy as jnp
from jax.experimental import pallas as pl
from jax.experimental.pallas import tpu as pltpu

_MAX_DMA_CHUNKS = 4  # few concurrent DMAs -> multiple DMA engines on big inputs


def _make_flatten_kernel(chunk_bounds):
    """Kernel factory: copies HBM->HBM in len(chunk_bounds) concurrent DMAs.

    chunk_bounds: static Python list of (row_start, row_size) covering the
    leading dim of the 2-D (B, flat) view.  All starts are issued before any
    wait so the copies overlap.
    """

    def kernel(x_hbm, o_hbm, sem):
        copies = []
        for c, (start, size) in enumerate(chunk_bounds):
            cp = pltpu.make_async_copy(
                x_hbm.at[pl.ds(start, size)],
                o_hbm.at[pl.ds(start, size)],
                sem.at[c],
            )
            cp.start()
            copies.append(cp)
        for cp in copies:
            cp.wait()

    return kernel


def flatten(x):
    """Pallas equivalent of torch Flatten: x.view(x.shape[0], -1)."""
    B = x.shape[0]
    flat = 1
    for d in x.shape[1:]:
        flat *= d

    # Free, contiguous, metadata-only flatten in the wrapper.
    x2d = jnp.reshape(x, (B, flat))

    # Static chunking of the leading dim into up to _MAX_DMA_CHUNKS DMAs.
    n_chunks = max(1, min(_MAX_DMA_CHUNKS, B))
    base, rem = divmod(B, n_chunks)
    chunk_bounds = []
    start = 0
    for c in range(n_chunks):
        size = base + (1 if c < rem else 0)
        if size > 0:
            chunk_bounds.append((start, size))
        start += size

    itemsize = jnp.dtype(x.dtype).itemsize
    kernel = _make_flatten_kernel(chunk_bounds)

    return pl.pallas_call(
        kernel,
        out_shape=jax.ShapeDtypeStruct((B, flat), x.dtype),
        # Raw HBM refs on both sides: no auto-DMA, no VMEM staging, no grid.
        in_specs=[pl.BlockSpec(memory_space=pl.ANY)],
        out_specs=pl.BlockSpec(memory_space=pl.ANY),
        scratch_shapes=[pltpu.SemaphoreType.DMA((len(chunk_bounds),))],
        cost_estimate=pl.CostEstimate(
            flops=0,
            transcendentals=0,
            bytes_accessed=2 * B * flat * itemsize,
        ),
    )(x2d)


if __name__ == "__main__":
    key = jax.random.PRNGKey(0)
    # Small NCHW input consistent with a conv-style module: (B=2, C=4, H=16, W=16)
    x = jax.random.normal(key, (2, 4, 16, 16), dtype=jnp.float32)

    out = flatten(x)
    out = jax.block_until_ready(out)

    # Verify against the pure-JAX reference of torch's x.view(B, -1)
    ref = x.reshape(x.shape[0], -1)
    assert out.shape == (2, 4 * 16 * 16), out.shape
    assert out.dtype == x.dtype
    assert jnp.array_equal(out, ref)

    print("KERNEL_OK")
</pallas_src>

<mosaic_0001>
module attributes {stable_mosaic.version = 11 : i64} {
  func.func @kernel(%arg0: memref<2x1024xf32, #tpu.memory_space<any>>, %arg1: memref<2x1024xf32, #tpu.memory_space<any>>, %arg2: memref<2x!tpu.dma_semaphore, #tpu.memory_space<semaphore_mem>>) attributes {dimension_semantics = [], scalar_prefetch = 0 : i64, scratch_operands = 1 : i64, tpu.core_type = #tpu.core_type<tc>} {
    %c0_i32 = arith.constant 0 : i32
    %c0_i32_0 = arith.constant 0 : i32
    %c0_i32_1 = arith.constant 0 : i32
    %0 = tpu.memref_slice %arg0[%c0_i32_0, %c0_i32_1] : memref<2x1024xf32, #tpu.memory_space<any>> -> memref<1x1024xf32, #tpu.memory_space<any>>
    %c0_i32_2 = arith.constant 0 : i32
    %c0_i32_3 = arith.constant 0 : i32
    %1 = tpu.memref_slice %arg1[%c0_i32_2, %c0_i32_3] : memref<2x1024xf32, #tpu.memory_space<any>> -> memref<1x1024xf32, #tpu.memory_space<any>>
    %2 = tpu.memref_slice %arg2[%c0_i32] : memref<2x!tpu.dma_semaphore, #tpu.memory_space<semaphore_mem>> -> memref<1x!tpu.dma_semaphore, #tpu.memory_space<semaphore_mem>>
    %3 = tpu.memref_squeeze %2 : memref<1x!tpu.dma_semaphore, #tpu.memory_space<semaphore_mem>> -> memref<!tpu.dma_semaphore, #tpu.memory_space<semaphore_mem>>
    tpu.enqueue_dma source(%0 : memref<1x1024xf32, #tpu.memory_space<any>>) target(%1 : memref<1x1024xf32, #tpu.memory_space<any>>) target_semaphore(%3 : memref<!tpu.dma_semaphore, #tpu.memory_space<semaphore_mem>>)
    %c1_i32 = arith.constant 1 : i32
    %c1_i32_4 = arith.constant 1 : i32
    %c0_i32_5 = arith.constant 0 : i32
    %4 = tpu.memref_slice %arg0[%c1_i32_4, %c0_i32_5] : memref<2x1024xf32, #tpu.memory_space<any>> -> memref<1x1024xf32, #tpu.memory_space<any>>
    %c1_i32_6 = arith.constant 1 : i32
    %c0_i32_7 = arith.constant 0 : i32
    %5 = tpu.memref_slice %arg1[%c1_i32_6, %c0_i32_7] : memref<2x1024xf32, #tpu.memory_space<any>> -> memref<1x1024xf32, #tpu.memory_space<any>>
    %6 = tpu.memref_slice %arg2[%c1_i32] : memref<2x!tpu.dma_semaphore, #tpu.memory_space<semaphore_mem>> -> memref<1x!tpu.dma_semaphore, #tpu.memory_space<semaphore_mem>>
    %7 = tpu.memref_squeeze %6 : memref<1x!tpu.dma_semaphore, #tpu.memory_space<semaphore_mem>> -> memref<!tpu.dma_semaphore, #tpu.memory_space<semaphore_mem>>
    tpu.enqueue_dma source(%4 : memref<1x1024xf32, #tpu.memory_space<any>>) target(%5 : memref<1x1024xf32, #tpu.memory_space<any>>) target_semaphore(%7 : memref<!tpu.dma_semaphore, #tpu.memory_space<semaphore_mem>>)
    %c0_i32_8 = arith.constant 0 : i32
    %c0_i32_9 = arith.constant 0 : i32
    %c0_i32_10 = arith.constant 0 : i32
    %8 = tpu.memref_slice %arg0[%c0_i32_9, %c0_i32_10] : memref<2x1024xf32, #tpu.memory_space<any>> -> memref<1x1024xf32, #tpu.memory_space<any>>
    %c0_i32_11 = arith.constant 0 : i32
    %c0_i32_12 = arith.constant 0 : i32
    %9 = tpu.memref_slice %arg1[%c0_i32_11, %c0_i32_12] : memref<2x1024xf32, #tpu.memory_space<any>> -> memref<1x1024xf32, #tpu.memory_space<any>>
    %10 = tpu.memref_slice %arg2[%c0_i32_8] : memref<2x!tpu.dma_semaphore, #tpu.memory_space<semaphore_mem>> -> memref<1x!tpu.dma_semaphore, #tpu.memory_space<semaphore_mem>>
    %11 = tpu.memref_squeeze %10 : memref<1x!tpu.dma_semaphore, #tpu.memory_space<semaphore_mem>> -> memref<!tpu.dma_semaphore, #tpu.memory_space<semaphore_mem>>
    tpu.wait_dma2 semaphore(%11 : memref<!tpu.dma_semaphore, #tpu.memory_space<semaphore_mem>>) src(%8 : memref<1x1024xf32, #tpu.memory_space<any>>) dst(%9 : memref<1x1024xf32, #tpu.memory_space<any>>)
    %c1_i32_13 = arith.constant 1 : i32
    %c1_i32_14 = arith.constant 1 : i32
    %c0_i32_15 = arith.constant 0 : i32
    %12 = tpu.memref_slice %arg0[%c1_i32_14, %c0_i32_15] : memref<2x1024xf32, #tpu.memory_space<any>> -> memref<1x1024xf32, #tpu.memory_space<any>>
    %c1_i32_16 = arith.constant 1 : i32
    %c0_i32_17 = arith.constant 0 : i32
    %13 = tpu.memref_slice %arg1[%c1_i32_16, %c0_i32_17] : memref<2x1024xf32, #tpu.memory_space<any>> -> memref<1x1024xf32, #tpu.memory_space<any>>
    %14 = tpu.memref_slice %arg2[%c1_i32_13] : memref<2x!tpu.dma_semaphore, #tpu.memory_space<semaphore_mem>> -> memref<1x!tpu.dma_semaphore, #tpu.memory_space<semaphore_mem>>
    %15 = tpu.memref_squeeze %14 : memref<1x!tpu.dma_semaphore, #tpu.memory_space<semaphore_mem>> -> memref<!tpu.dma_semaphore, #tpu.memory_space<semaphore_mem>>
    tpu.wait_dma2 semaphore(%15 : memref<!tpu.dma_semaphore, #tpu.memory_space<semaphore_mem>>) src(%12 : memref<1x1024xf32, #tpu.memory_space<any>>) dst(%13 : memref<1x1024xf32, #tpu.memory_space<any>>)
    return
  }
}

</mosaic_0001>

<llo_original>
// kernel: tpu_custom_call.1
$region0: #{tpu_custom_call.1}
  #allocation0 [shape = 'u32[]', space=smem, size = 0x4, offset = 0x4, fixed_abs, tag = 'smem constant byte address 0x4 - core index']
  #allocation1 [shape = 'u32[144,128]{1,0:T(1,128)}', space=vmem, size = 0x12000, scoped, tag = 'internal scratch']
  #allocation2 [shape = 's32[2]{0}', space=sflag, size = 0x8, scoped, tag = 'scratch operand']
  #allocation3 [shape = 's32[]', space=sflag, size = 0x4, offset = 0, fixed_abs, tag = 'sflag constant byte address 0x0 - dummy sync flag']
  #allocation5 [shape = 's32[]', space=sflag, size = 0x4, offset = 0, fixed_abs, tag = 'sflag constant byte address 0x0 - dummy sync flag']
  %s0 = inlined_call_operand.hbm [shape: f32[2,1024], index: 0, kind: input, shape index: {}]
  %s1 = inlined_call_operand.hbm [shape: f32[2,1024], index: 1, kind: output, shape index: {}]
  %s2 = sld [smem:[#allocation0]]
  $region2: #{tpu_custom_call.1} parent=0
    _
  %s4 = ssub.s32 1, %s2
  %s5 = scalar_select 0, %s4, %s2
  $region1: #{tpu_custom_call.1} parent=0
    #allocation4 [shape = 'u32[3]{0}', space=smem, size = 0xc, scoped, tag = 'DMA stride descriptor']
    #allocation6 [shape = 'u32[3]{0}', space=smem, size = 0xc, scoped, tag = 'DMA stride descriptor']
    %s7 = sshll.u32 1, 14
    %s8 = sxor.u32 4294967295, %s7
    %12 = sst [smem:[#allocation4]] 32
    %s13 = scalar_lea.smem [#allocation4], 1
    %14 = sst [smem:[%s13]] 32
    %s15 = scalar_lea.smem [#allocation4], 2
    %16 = sst [smem:[%s15]] 1
    %18 = dma.general %s0, 128, %s1, [#allocation2], 131072, [#allocation4], 0, 0
    %s19 = scalar_lea.hbm %s0, 16
    %s20 = scalar_lea.hbm %s1, 16
    %s21 = scalar_lea.sflag [#allocation2], 1
    %s23 = sshll.u32 1, 14
    %s24 = sxor.u32 4294967295, %s23
    %28 = sst [smem:[#allocation6]] 32
    %s29 = scalar_lea.smem [#allocation6], 1
    %30 = sst [smem:[%s29]] 32
    %s31 = scalar_lea.smem [#allocation6], 2
    %32 = sst [smem:[%s31]] 1
    %34 = dma.general %s19, 128, %s20, %s21, 131072, [#allocation6], 0, 0
    %s35 = smul.u32 1, 8
    %s36 = sshll.u32 %s35, 4
    %37 = dma.done [#allocation2], %s36
    %s38 = sshll.u32 %s35, 4
    %39 = dma.done %s21, %s38
  %40 = vsyncmov [#allocation2]
  %s41 = vpop.sfrf %40
  %p42 = scmp.eq.s32.totalorder %s41, 0
  %p43 = pneg %p42
  %45 = shalt.err (%p43)
  %s46 = scalar_lea.sflag [#allocation2], 1
  %47 = vsyncmov %s46
  %s48 = vpop.sfrf %47
  %p49 = scmp.eq.s32.totalorder %s48, 0
  %p50 = pneg %p49
  %52 = shalt.err (%p50)

</llo_original>
